<compile_context>
chip_gen: v5e
topology: v5e:2x2
jax: 0.10.0
libtpu: 0.0.40
codegen_flags: <defaults>
</compile_context>

<pallas_src>
import functools

import jax
import jax.numpy as jnp
from jax.experimental import pallas as pl
from jax.experimental.pallas import tpu as pltpu


# ----------------------------------------------------------------------------
# Pallas kernel
# ----------------------------------------------------------------------------
def _mask_sample_kernel(idx_ref, noise_ref, perturb_ref, out_ref):
    """out = where(column is one of the row's ablated indices, noise+perturb, 1).

    idx_ref     : (tile, n_idx) int32   flat column indices to ablate, per row
    noise_ref   : (tile, W)     float32 uniform noise  (torch.rand_like equiv)
    perturb_ref : (1, W)        float32 learnable perturbation (row-broadcast)
    out_ref     : (tile, W)     float32
    """
    tile, W = noise_ref.shape
    n_idx = idx_ref.shape[1]

    col = jax.lax.broadcasted_iota(jnp.int32, (tile, W), 1)
    idx = idx_ref[...]                              # (tile, n_idx), n_idx small

    hit = col == idx[:, 0].reshape(tile, 1)
    for j in range(1, n_idx):                       # static & tiny -> unrolled
        hit = jnp.logical_or(hit, col == idx[:, j].reshape(tile, 1))

    ablated = noise_ref[...] + perturb_ref[...]     # (tile, W) via broadcast
    out_ref[...] = jnp.where(hit, ablated, 1.0)


def sample_masks(idx, noise, perturb):
    """Fused mask sampling.

    idx     : (bsz, n_idx) int32  -- flat ablation indices into [0, W)
    noise   : (bsz, W)     f32
    perturb : (1, W)       f32
    returns : (bsz, W)     f32
    """
    bsz, W = noise.shape
    n_idx = idx.shape[1]

    # Row tile: multiple of 8 (sublane), capped at 512 to fit v7x's 64 MiB VMEM
    # comfortably even at large bsz; full-lane-width W blocks (lane dense).
    row_tile = min(512, ((bsz + 7) // 8) * 8)
    padded = pl.cdiv(bsz, row_tile) * row_tile
    if padded != bsz:
        pad = padded - bsz
        idx = jnp.pad(idx, ((0, pad), (0, 0)))
        noise = jnp.pad(noise, ((0, pad), (0, 0)))

    out = pl.pallas_call(
        _mask_sample_kernel,
        out_shape=jax.ShapeDtypeStruct((padded, W), jnp.float32),
        grid=(padded // row_tile,),
        in_specs=[
            pl.BlockSpec((row_tile, n_idx), lambda i: (i, 0)),
            pl.BlockSpec((row_tile, W), lambda i: (i, 0)),
            pl.BlockSpec((1, W), lambda i: (0, 0)),
        ],
        out_specs=pl.BlockSpec((row_tile, W), lambda i: (i, 0)),
        compiler_params=pltpu.CompilerParams(
            dimension_semantics=("parallel",)),
    )(idx, noise, perturb)
    return out[:bsz]


# ----------------------------------------------------------------------------
# Pure-JAX reference (used only in __main__, never on the hot path)
# ----------------------------------------------------------------------------
def _ref_masks(idx, noise, perturb):
    bsz, W = noise.shape
    base = jnp.ones((bsz, W), jnp.float32)
    base = base.at[jnp.arange(bsz)[:, None], idx].set(0.0)
    return base + (1.0 - base) * (noise + perturb)


# ----------------------------------------------------------------------------
# Jitted forward implementation (pure function of key + params)
# ----------------------------------------------------------------------------
def _forward_impl(key, perturb, *, n_layers, n_heads, bsz, k):
    L, H = n_layers, n_heads
    LH = L * H
    (k_attn_top, k_attn_noise, k_kqv_top,
     k_noise_k, k_noise_q, k_noise_v) = jax.random.split(key, 6)

    # top-k draws (same "ablate k random positions" semantics as torch topk)
    _, top_attn = jax.lax.top_k(jax.random.uniform(k_attn_top, (bsz, LH)), k)
    _, top_kqv = jax.lax.top_k(jax.random.uniform(k_kqv_top, (bsz, 3 * LH)), k)

    # fused lane-dense layout: columns [attn | k | q | v], width 4*LH.
    # attn indices live in [0, LH); kqv indices shift by +LH into [LH, 4*LH).
    idx_all = jnp.concatenate(
        [top_attn.astype(jnp.int32), top_kqv.astype(jnp.int32) + LH], axis=1)

    noise_all = jnp.concatenate(
        [jax.random.uniform(k_attn_noise, (bsz, LH)),
         jax.random.uniform(k_noise_k, (bsz, LH)),
         jax.random.uniform(k_noise_q, (bsz, LH)),
         jax.random.uniform(k_noise_v, (bsz, LH))], axis=1)

    pert_all = jnp.concatenate(
        [perturb["attn"].reshape(1, LH),
         perturb["k"].reshape(1, LH),
         perturb["q"].reshape(1, LH),
         perturb["v"].reshape(1, LH)], axis=1)

    masks = sample_masks(idx_all, noise_all, pert_all)      # (bsz, 4*LH)
    masks = masks.reshape(bsz, 4, L, H)
    attn, k_m, q_m, v_m = masks[:, 0], masks[:, 1], masks[:, 2], masks[:, 3]

    # Per-layer slices are taken INSIDE the jit so they fuse into one dispatch
    # while preserving the original dict-of-per-layer-lists structure.
    sampled = {
        "attn": [attn[:, i] for i in range(L)],
        "k": [k_m[:, i] for i in range(L)],
        "q": [q_m[:, i] for i in range(L)],
        "v": [v_m[:, i] for i in range(L)],
        "mlp": [jnp.ones((bsz,), jnp.float32) for _ in range(L)],
    }
    return sampled


# ----------------------------------------------------------------------------
# Module
# ----------------------------------------------------------------------------
class MultiComponentMaskSampler:
    """JAX/Pallas port of mask_samplers.AblationMaskSampler.MultiComponentMaskSampler."""

    def __init__(self, n_layers, n_heads, batch_size, n_samples, k):
        self.n_layers = n_layers
        self.n_heads = n_heads
        self.batch_size = batch_size
        self.n_samples = n_samples
        self.k = k
        self.sampled_mask = None
        # Parameters: zeros, exactly as in the torch __init__ (deterministic).
        self.mask_perturb = {
            "attn": jnp.zeros((n_layers, n_heads), jnp.float32),
            "k": jnp.zeros((n_layers, n_heads), jnp.float32),
            "q": jnp.zeros((n_layers, n_heads), jnp.float32),
            "v": jnp.zeros((n_layers, n_heads), jnp.float32),
            "mlp": jnp.zeros((n_layers, 1), jnp.float32),
        }
        self._forward_jit = jax.jit(functools.partial(
            _forward_impl,
            n_layers=n_layers, n_heads=n_heads,
            bsz=batch_size * n_samples, k=k))

    def forward(self, key):
        self.sampled_mask = self._forward_jit(key, self.mask_perturb)
        return (0, {})


# ----------------------------------------------------------------------------
if __name__ == "__main__":
    # small config consistent with the module: bsz = batch_size * n_samples = 8
    n_layers, n_heads, batch_size, n_samples, k = 4, 8, 2, 4, 3
    bsz = batch_size * n_samples
    LH = n_layers * n_heads
    W = 4 * LH

    # ---- standalone kernel-vs-reference correctness check (not on hot path)
    chk_key = jax.random.PRNGKey(0)
    k_idx, k_noise = jax.random.split(chk_key)
    ridx = jax.random.randint(k_idx, (bsz, 2 * k), 0, W, dtype=jnp.int32)
    rnoise = jax.random.uniform(k_noise, (bsz, W), dtype=jnp.float32)
    rpert = 0.01 * jnp.arange(W, dtype=jnp.float32).reshape(1, W)
    got = jax.block_until_ready(sample_masks(ridx, rnoise, rpert))
    want = _ref_masks(ridx, rnoise, rpert)
    assert jnp.allclose(got, want, atol=1e-6), "kernel mismatch vs reference"

    # ---- full (jitted) forward
    sampler = MultiComponentMaskSampler(n_layers, n_heads, batch_size,
                                        n_samples, k)
    loss, aux = sampler.forward(jax.random.PRNGKey(1))

    # block on all produced masks
    for name in ("attn", "k", "q", "v", "mlp"):
        for m in sampler.sampled_mask[name]:
            jax.block_until_ready(m)

    # light shape/semantic sanity checks
    assert len(sampler.sampled_mask["attn"]) == n_layers
    assert sampler.sampled_mask["attn"][0].shape == (bsz, n_heads)
    assert sampler.sampled_mask["k"][0].shape == (bsz, n_heads)
    assert sampler.sampled_mask["mlp"][0].shape == (bsz,)
    assert loss == 0 and aux == {}

    print("KERNEL_OK")
</pallas_src>

<mosaic_0001>
module attributes {stable_mosaic.version = 11 : i64} {
  func.func @_mask_sample_kernel(%arg0: i32, %arg1: memref<8x6xi32, #tpu.memory_space<vmem>>, %arg2: memref<8x128xf32, #tpu.memory_space<vmem>>, %arg3: memref<1x128xf32, #tpu.memory_space<vmem>>, %arg4: memref<8x128xf32, #tpu.memory_space<vmem>>) attributes {dimension_semantics = [#tpu.dimension_semantics<parallel>], iteration_bounds = array<i64: 1>, scalar_prefetch = 0 : i64, scratch_operands = 0 : i64, tpu.core_type = #tpu.core_type<tc>, window_params = [{transform_indices = @transform_0, window_bounds = array<i64: 8, 6>}, {transform_indices = @transform_1, window_bounds = array<i64: 8, 128>}, {pipeline_mode = #tpu.pipeline_mode<synchronous>, transform_indices = @transform_2, window_bounds = array<i64: 1, 128>}, {transform_indices = @transform_3, window_bounds = array<i64: 8, 128>}]} {
    %0 = tpu.iota {dimensions = array<i32: 1>} : vector<8x128xi32>
    %c0 = arith.constant 0 : index
    %c0_0 = arith.constant 0 : index
    %1 = vector.load %arg1[%c0, %c0_0] : memref<8x6xi32, #tpu.memory_space<vmem>>, vector<8x6xi32>
    %2 = vector.extract_strided_slice %1 {offsets = [0, 0], sizes = [8, 1], strides = [1, 1]} : vector<8x6xi32> to vector<8x1xi32>
    %3 = vector.shape_cast %2 : vector<8x1xi32> to vector<8xi32>
    %4 = vector.shape_cast %3 : vector<8xi32> to vector<8x1xi32>
    %5 = vector.broadcast %4 : vector<8x1xi32> to vector<8x128xi32>
    %6 = arith.cmpi eq, %0, %5 : vector<8x128xi32>
    %7 = vector.extract_strided_slice %1 {offsets = [0, 1], sizes = [8, 1], strides = [1, 1]} : vector<8x6xi32> to vector<8x1xi32>
    %8 = vector.shape_cast %7 : vector<8x1xi32> to vector<8xi32>
    %9 = vector.shape_cast %8 : vector<8xi32> to vector<8x1xi32>
    %10 = vector.broadcast %9 : vector<8x1xi32> to vector<8x128xi32>
    %11 = arith.cmpi eq, %0, %10 : vector<8x128xi32>
    %12 = arith.ori %6, %11 : vector<8x128xi1>
    %13 = vector.extract_strided_slice %1 {offsets = [0, 2], sizes = [8, 1], strides = [1, 1]} : vector<8x6xi32> to vector<8x1xi32>
    %14 = vector.shape_cast %13 : vector<8x1xi32> to vector<8xi32>
    %15 = vector.shape_cast %14 : vector<8xi32> to vector<8x1xi32>
    %16 = vector.broadcast %15 : vector<8x1xi32> to vector<8x128xi32>
    %17 = arith.cmpi eq, %0, %16 : vector<8x128xi32>
    %18 = arith.ori %12, %17 : vector<8x128xi1>
    %19 = vector.extract_strided_slice %1 {offsets = [0, 3], sizes = [8, 1], strides = [1, 1]} : vector<8x6xi32> to vector<8x1xi32>
    %20 = vector.shape_cast %19 : vector<8x1xi32> to vector<8xi32>
    %21 = vector.shape_cast %20 : vector<8xi32> to vector<8x1xi32>
    %22 = vector.broadcast %21 : vector<8x1xi32> to vector<8x128xi32>
    %23 = arith.cmpi eq, %0, %22 : vector<8x128xi32>
    %24 = arith.ori %18, %23 : vector<8x128xi1>
    %25 = vector.extract_strided_slice %1 {offsets = [0, 4], sizes = [8, 1], strides = [1, 1]} : vector<8x6xi32> to vector<8x1xi32>
    %26 = vector.shape_cast %25 : vector<8x1xi32> to vector<8xi32>
    %27 = vector.shape_cast %26 : vector<8xi32> to vector<8x1xi32>
    %28 = vector.broadcast %27 : vector<8x1xi32> to vector<8x128xi32>
    %29 = arith.cmpi eq, %0, %28 : vector<8x128xi32>
    %30 = arith.ori %24, %29 : vector<8x128xi1>
    %31 = vector.extract_strided_slice %1 {offsets = [0, 5], sizes = [8, 1], strides = [1, 1]} : vector<8x6xi32> to vector<8x1xi32>
    %32 = vector.shape_cast %31 : vector<8x1xi32> to vector<8xi32>
    %33 = vector.shape_cast %32 : vector<8xi32> to vector<8x1xi32>
    %34 = vector.broadcast %33 : vector<8x1xi32> to vector<8x128xi32>
    %35 = arith.cmpi eq, %0, %34 : vector<8x128xi32>
    %36 = arith.ori %30, %35 : vector<8x128xi1>
    %c0_1 = arith.constant 0 : index
    %c0_2 = arith.constant 0 : index
    %37 = vector.load %arg2[%c0_1, %c0_2] : memref<8x128xf32, #tpu.memory_space<vmem>>, vector<8x128xf32>
    %c0_3 = arith.constant 0 : index
    %c0_4 = arith.constant 0 : index
    %38 = vector.load %arg3[%c0_3, %c0_4] : memref<1x128xf32, #tpu.memory_space<vmem>>, vector<1x128xf32>
    %39 = vector.broadcast %38 : vector<1x128xf32> to vector<8x128xf32>
    %40 = arith.addf %37, %39 : vector<8x128xf32>
    %cst = arith.constant 1.000000e+00 : f32
    %41 = vector.broadcast %cst : f32 to vector<8x128xf32>
    %42 = arith.select %36, %40, %41 : vector<8x128xi1>, vector<8x128xf32>
    %c0_5 = arith.constant 0 : index
    %c0_6 = arith.constant 0 : index
    %43 = vector.load %arg4[%c0_5, %c0_6] : memref<8x128xf32, #tpu.memory_space<vmem>>, vector<8x128xf32>
    tpu.vector_store %arg4[%c0_5, %c0_6], %42 {strides = array<i32>} : memref<8x128xf32, #tpu.memory_space<vmem>>, vector<8x128xf32>,
    return
  }
  func.func @transform_0(%arg0: i32) -> (i32, i32) {
    %c0_i32 = arith.constant 0 : i32
    %c0_i32_0 = arith.constant 0 : i32
    return %arg0, %c0_i32 : i32, i32
  }
  func.func @transform_1(%arg0: i32) -> (i32, i32) {
    %c0_i32 = arith.constant 0 : i32
    %c0_i32_0 = arith.constant 0 : i32
    return %arg0, %c0_i32 : i32, i32
  }
  func.func @transform_2(%arg0: i32) -> (i32, i32) {
    %c0_i32 = arith.constant 0 : i32
    %c0_i32_0 = arith.constant 0 : i32
    %c0_i32_1 = arith.constant 0 : i32
    return %c0_i32, %c0_i32_0 : i32, i32
  }
  func.func @transform_3(%arg0: i32) -> (i32, i32) {
    %c0_i32 = arith.constant 0 : i32
    %c0_i32_0 = arith.constant 0 : i32
    return %arg0, %c0_i32 : i32, i32
  }
}

</mosaic_0001>

<llo_original>
// kernel: tpu_custom_call.1
$region0: #{tpu_custom_call.1}
  #allocation0 [shape = 'u32[]', space=smem, size = 0x4, offset = 0x4, fixed_abs, tag = 'smem constant byte address 0x4 - core index']
  #allocation1 [shape = 'u32[72,128]{1,0:T(1,128)}', space=vmem, size = 0x9000, scoped, tag = 'internal scratch']
  %s0 = inlined_call_operand.hbm [shape: s32[8,6], index: 0, kind: input, shape index: {}]
  %s1 = inlined_call_operand.hbm [shape: f32[8,128], index: 1, kind: input, shape index: {}]
  %s2 = inlined_call_operand.vmem [shape: f32[1,128], index: 2, kind: input, shape index: {}]
  %s3 = inlined_call_operand.hbm [shape: f32[8,128], index: 3, kind: output, shape index: {}]
  %s4 = sld [smem:[#allocation0]]
  $region30: #{tpu_custom_call.1} parent=0
    _
  %s6 = ssub.s32 1, %s4
  %s7 = scalar_select 0, %s6, %s4
  $region1: #{tpu_custom_call.1} parent=0
    #allocation2 [shape = 'u8[4096]{0}', space=vmem, size = 0x1000, scoped, tag = 'input window, operand 0, single buffered']
    #allocation3 [shape = 's32[1]{0}', space=sflag, size = 0x4, scoped, tag = 'scoped memory for tpu_custom_call.1']
    #allocation4 [shape = 's32[1]{0}', space=sflag, size = 0x4, scoped, tag = 'scoped memory for tpu_custom_call.1']
    #allocation5 [shape = 'u8[4096]{0}', space=vmem, size = 0x1000, scoped, tag = 'input window, operand 1, single buffered']
    #allocation6 [shape = 's32[1]{0}', space=sflag, size = 0x4, scoped, tag = 'scoped memory for tpu_custom_call.1']
    #allocation7 [shape = 'u8[4096]{0}', space=vmem, size = 0x1000, scoped, tag = 'output window, operand 0, single buffered']
    %8 = vsyncpa [#allocation3], 0
    %9 = vsyncpa [#allocation6], 0
    %10 = vsyncpa [#allocation4], 0
    // Predicated region
    $region2: #{tpu_custom_call.1} parent=1 // pred_check
      _
    $region3: #{tpu_custom_call.1} parent=1 // pred_check_branch
      %12 = sbr.rel (0) target = $region5
    $region4: #{tpu_custom_call.1} parent=1 // pred_region
      %14 = vsyncadd [#allocation3], 0
      %s16 = sshll.u32 %s0, 4
      %s17 = int_to_ptr.hbm [resolvable:$true] %s16
      %s18 = sshll.u32 [#allocation2], 4
      %s19 = int_to_ptr.vmem [resolvable:$true] %s18
      %21 = dma.hbm_to_vmem [thread:$0]  %s17, 128, %s19, [#allocation3]
    $region5: #{tpu_custom_call.1} parent=1 // pred_fallthru
      _
    // Predicated region
    $region6: #{tpu_custom_call.1} parent=1 // pred_check
      _
    $region7: #{tpu_custom_call.1} parent=1 // pred_check_branch
      %23 = sbr.rel (0) target = $region9
    $region8: #{tpu_custom_call.1} parent=1 // pred_region
      %25 = vsyncadd [#allocation6], 0
      %s27 = sshll.u32 %s1, 4
      %s28 = int_to_ptr.hbm [resolvable:$true] %s27
      %s29 = sshll.u32 [#allocation5], 4
      %s30 = int_to_ptr.vmem [resolvable:$true] %s29
      %32 = dma.hbm_to_vmem [thread:$0]  %s28, 128, %s30, [#allocation6]
    $region9: #{tpu_custom_call.1} parent=1 // pred_fallthru
      _
    // Predicated region
    $region10: #{tpu_custom_call.1} parent=1 // pred_check
      _
    $region11: #{tpu_custom_call.1} parent=1 // pred_check_branch
      %34 = sbr.rel (0) target = $region13
    $region12: #{tpu_custom_call.1} parent=1 // pred_region
      _
    $region13: #{tpu_custom_call.1} parent=1 // pred_fallthru
      _
    // Predicated region
    $region14: #{tpu_custom_call.1} parent=1 // pred_check
      _
    $region15: #{tpu_custom_call.1} parent=1 // pred_check_branch
      %36 = sbr.rel (0) target = $region17
    $region16: #{tpu_custom_call.1} parent=1 // pred_region
      %38 = dma.done [#allocation3], 128
    $region17: #{tpu_custom_call.1} parent=1 // pred_fallthru
      _
    // Predicated region
    $region18: #{tpu_custom_call.1} parent=1 // pred_check
      _
    $region19: #{tpu_custom_call.1} parent=1 // pred_check_branch
      %40 = sbr.rel (0) target = $region21
    $region20: #{tpu_custom_call.1} parent=1 // pred_region
      %42 = dma.done [#allocation6], 128
    $region21: #{tpu_custom_call.1} parent=1 // pred_fallthru
      _
    %v43 = vlaneseq
    %v44 = vand.u32 %v43, 127
    %v45 = vld [vmem:[#allocation2] sm:$0xff]
    %46 = vset.pattern.permute.xlu0 0
    %47 = vperm.xlu0 %46, %v45
    %v48 = vpop.permute.xlu0 %47
    %vm49 = vcmp.eq.s32.totalorder %v44, %v48
    %50 = vset.pattern.permute.xlu0 1
    %51 = vperm.xlu0 %50, %v45
    %v52 = vpop.permute.xlu0 %51
    %vm53 = vcmp.eq.s32.totalorder %v44, %v52
    %vm54 = vmor %vm49, %vm53
    %55 = vset.pattern.permute.xlu0 2
    %56 = vperm.xlu0 %55, %v45
    %v57 = vpop.permute.xlu0 %56
    %vm58 = vcmp.eq.s32.totalorder %v44, %v57
    %vm59 = vmor %vm54, %vm58
    %60 = vset.pattern.permute.xlu0 3
    %61 = vperm.xlu0 %60, %v45
    %v62 = vpop.permute.xlu0 %61
    %vm63 = vcmp.eq.s32.totalorder %v44, %v62
    %vm64 = vmor %vm59, %vm63
    %65 = vset.pattern.permute.xlu0 4
    %66 = vperm.xlu0 %65, %v45
    %v67 = vpop.permute.xlu0 %66
    %vm68 = vcmp.eq.s32.totalorder %v44, %v67
    %vm69 = vmor %vm64, %vm68
    %70 = vset.pattern.permute.xlu0 5
    %71 = vperm.xlu0 %70, %v45
    %v72 = vpop.permute.xlu0 %71
    %vm73 = vcmp.eq.s32.totalorder %v44, %v72
    %vm74 = vmor %vm69, %vm73
    %v75 = vld [vmem:[#allocation5] sm:$0xff]
    %v76 = vld [vmem:[%s2] sm:$0x1]
    %v78 = vperm.slane %v76, 0
    %v80 = vadd.f32 %v75, %v78
    %v81 = vsel %vm74, %v80, 1.0
    %82 = vst [vmem:[#allocation7] sm:$0xff] %v81
    // Predicated region
    $region22: #{tpu_custom_call.1} parent=1 // pred_check
      _
    $region23: #{tpu_custom_call.1} parent=1 // pred_check_branch
      %84 = sbr.rel (0) target = $region25
    $region24: #{tpu_custom_call.1} parent=1 // pred_region
      %86 = vsyncadd [#allocation4], 0
      %s88 = sshll.u32 [#allocation7], 4
      %s89 = int_to_ptr.vmem [resolvable:$true] %s88
      %s90 = sshll.u32 %s3, 4
      %s91 = int_to_ptr.hbm [resolvable:$true] %s90
      %93 = dma.vmem_to_hbm [thread:$0]  %s89, 128, %s91, [#allocation4]
    $region25: #{tpu_custom_call.1} parent=1 // pred_fallthru
      _
    // Predicated region
    $region26: #{tpu_custom_call.1} parent=1 // pred_check
      _
    $region27: #{tpu_custom_call.1} parent=1 // pred_check_branch
      %95 = sbr.rel (0) target = $region29
    $region28: #{tpu_custom_call.1} parent=1 // pred_region
      %97 = dma.done [#allocation4], 128
    $region29: #{tpu_custom_call.1} parent=1 // pred_fallthru
      _
    %98 = vsyncpa [#allocation3], 1
    %99 = vsyncpa [#allocation6], 1
    %100 = vsyncpa [#allocation4], 1

</llo_original>
